<compile_context>
chip_gen: v6e
topology: v6e:2x2x1
jax: 0.10.0
libtpu: 0.0.40
codegen_flags: <defaults>
</compile_context>

<pallas_src>
import jax
import jax.numpy as jnp
from jax.experimental import pallas as pl
from jax.experimental.pallas import tpu as pltpu


def _scale_kernel(mult_ref, x_ref, o_ref):
    # mult_ref: (1, 1) float32 scalar in SMEM (already resolved to scale-or-1.0
    # in the wrapper, so no per-step compare/select).
    o_ref[...] = (x_ref[...] * mult_ref[0, 0]).astype(o_ref.dtype)


def scale_factor_forward(x: jax.Array,
                         scale_factor: jax.Array,
                         *,
                         lane_width: int = 1024,
                         tile_rows: int = 512,
                         donate_input: bool = False) -> jax.Array:
    """ScaleFactor.forward: x * scale_factor if scale_factor != 0 else x.

    x:            any shape / float dtype.
    scale_factor: scalar (the frozen nn.Parameter of the module).
    lane_width:   lane-dense slab width (multiple of 128).
    tile_rows:    rows per grid step (multiple of 32 -> valid for f32/bf16/int8).
    """
    assert lane_width % 128 == 0, "lane_width must be a multiple of 128"
    assert tile_rows % 32 == 0 and tile_rows > 0

    orig_shape = x.shape
    orig_dtype = x.dtype

    # Hoist the fitted/unfitted select out of the kernel (scalar op, free).
    mult = jnp.where(scale_factor != 0.0, scale_factor, 1.0)
    mult_smem = jnp.asarray(mult, jnp.float32).reshape(1, 1)

    # Flatten to a lane-dense slab; pad the tail so the last row is full.
    n = x.size
    rows = -(-n // lane_width)            # static cdiv
    padded = rows * lane_width
    flat = x.reshape(-1)
    if padded != n:
        flat = jnp.pad(flat, (0, padded - n))
    x2 = flat.reshape(rows, lane_width)

    # Block: as large as possible but never bigger than the array (the
    # "equals full dim" exception covers small / oddly-sized inputs).
    tr = min(tile_rows, rows)
    grid = (pl.cdiv(rows, tr),)           # ragged last block handled by Pallas

    # Explicit VMEM budget: ~2 bufs in + 2 bufs out per block, with headroom.
    block_bytes = tr * lane_width * x2.dtype.itemsize
    vmem_limit = max(32 << 20, 6 * block_bytes)

    out2 = pl.pallas_call(
        _scale_kernel,
        out_shape=jax.ShapeDtypeStruct((rows, lane_width), orig_dtype),
        grid_spec=pl.GridSpec(
            grid=grid,
            in_specs=[
                # scalar parameter -> SMEM, same block every grid step
                pl.BlockSpec(memory_space=pltpu.MemorySpace.SMEM),
                # lane-dense feature slab -> VMEM, big tiles
                pl.BlockSpec((tr, lane_width), lambda i: (i, 0)),
            ],
            out_specs=pl.BlockSpec((tr, lane_width), lambda i: (i, 0)),
        ),
        compiler_params=pltpu.CompilerParams(
            dimension_semantics=("parallel",),   # lets v7x split rows over 2 TCs
            vmem_limit_bytes=int(vmem_limit),
        ),
        # Optionally reuse the input HBM buffer for the output (x2 is an
        # intermediate built in this wrapper, so aliasing is safe when the
        # caller no longer needs x).
        input_output_aliases=({1: 0} if donate_input else {}),
    )(mult_smem, x2)

    out = out2.reshape(-1)
    if padded != n:
        out = out[:n]
    return out.reshape(orig_shape)


# TODO(synk): the _observe()/fit_() variance-accumulation path and index_fn
# callback mutate host-side python state during fitting; they have no bearing
# on the forward output and are intentionally not reproduced inside the kernel.
# TODO(synk): in a full PaiNN graph this multiply should ideally be fused into
# the adjacent message-passing kernel's epilogue to avoid the extra HBM round
# trip; as a standalone module it is implemented here as a streaming kernel.


if __name__ == "__main__":
    key = jax.random.PRNGKey(0)

    # Small, PaiNN-like edge-feature shape that is NOT a multiple of the tile
    # (exercises the flatten/pad/cdiv path).
    N, D = 37, 96
    x = jax.random.normal(key, (N, D), dtype=jnp.float32)

    # nn.Parameter(torch.tensor(0.0)): exercise both unfitted (identity) and
    # fitted (scale) paths.
    scale_unfitted = jnp.float32(0.0)
    scale_fitted = jnp.float32(1.75)

    y_unfitted = jax.block_until_ready(scale_factor_forward(x, scale_unfitted))
    y_fitted = jax.block_until_ready(scale_factor_forward(x, scale_fitted))

    assert y_unfitted.shape == x.shape and y_fitted.shape == x.shape
    assert jnp.allclose(y_unfitted, x), "unfitted path must be identity"
    assert jnp.allclose(y_fitted, x * 1.75), "fitted path must scale by scale_factor"

    # bf16 activations: product is computed in f32 and cast back to bf16.
    xb = jax.random.normal(jax.random.PRNGKey(1), (8, 32), dtype=jnp.bfloat16)
    yb = jax.block_until_ready(scale_factor_forward(xb, scale_fitted))
    ref_b = (xb.astype(jnp.float32) * 1.75).astype(jnp.bfloat16)
    assert yb.dtype == jnp.bfloat16
    assert jnp.allclose(yb.astype(jnp.float32), ref_b.astype(jnp.float32)), \
        "bf16 path must match f32-accumulated reference"

    print("KERNEL_OK")
</pallas_src>

<mosaic_0001>
module attributes {stable_mosaic.version = 11 : i64} {
  func.func @_scale_kernel(%arg0: i32, %arg1: memref<1x1xf32, #tpu.memory_space<smem>>, %arg2: memref<4x1024xf32, #tpu.memory_space<vmem>>, %arg3: memref<4x1024xf32, #tpu.memory_space<vmem>>) attributes {dimension_semantics = [#tpu.dimension_semantics<parallel>], iteration_bounds = array<i64: 1>, scalar_prefetch = 0 : i64, scratch_operands = 0 : i64, tpu.core_type = #tpu.core_type<tc>, window_params = [{transform_indices = @transform_0, window_bounds = array<i64: 1, 1>}, {transform_indices = @transform_1, window_bounds = array<i64: 4, 1024>}, {transform_indices = @transform_2, window_bounds = array<i64: 4, 1024>}]} {
    %c0 = arith.constant 0 : index
    %c0_0 = arith.constant 0 : index
    %0 = vector.load %arg2[%c0, %c0_0] : memref<4x1024xf32, #tpu.memory_space<vmem>>, vector<4x1024xf32>
    %c0_1 = arith.constant 0 : index
    %c0_2 = arith.constant 0 : index
    %1 = memref.load %arg1[%c0_1, %c0_2] : memref<1x1xf32, #tpu.memory_space<smem>>
    %2 = vector.broadcast %1 : f32 to vector<4x1024xf32>
    %3 = arith.mulf %0, %2 : vector<4x1024xf32>
    %c0_3 = arith.constant 0 : index
    %c0_4 = arith.constant 0 : index
    %4 = vector.load %arg3[%c0_3, %c0_4] : memref<4x1024xf32, #tpu.memory_space<vmem>>, vector<4x1024xf32>
    tpu.vector_store %arg3[%c0_3, %c0_4], %3 {strides = array<i32>} : memref<4x1024xf32, #tpu.memory_space<vmem>>, vector<4x1024xf32>,
    return
  }
  func.func @transform_0(%arg0: i32) -> (i32, i32) {
    %c0_i32 = arith.constant 0 : i32
    %c0_i32_0 = arith.constant 0 : i32
    %c0_i32_1 = arith.constant 0 : i32
    return %c0_i32, %c0_i32_0 : i32, i32
  }
  func.func @transform_1(%arg0: i32) -> (i32, i32) {
    %c0_i32 = arith.constant 0 : i32
    %c0_i32_0 = arith.constant 0 : i32
    return %arg0, %c0_i32 : i32, i32
  }
  func.func @transform_2(%arg0: i32) -> (i32, i32) {
    %c0_i32 = arith.constant 0 : i32
    %c0_i32_0 = arith.constant 0 : i32
    return %arg0, %c0_i32 : i32, i32
  }
}

</mosaic_0001>

<llo_original>
// kernel: tpu_custom_call.1
$region0: #{tpu_custom_call.1}
  #allocation0 [shape = 'u32[]', space=smem, size = 0x4, offset = 0x4, fixed_abs, tag = 'smem constant byte address 0x4 - core index']
  #allocation1 [shape = 'u32[144,128]{1,0:T(1,128)}', space=vmem, size = 0x12000, scoped, tag = 'internal scratch']
  #allocation2 [shape = 'f32[1,1]{1,0:T(1,128)S(6)}', space=smem, size = 0x200, scoped, tag = 'scoped memory for tpu_custom_call.1']
  %s0 = inlined_call_operand.<no memory space> [shape: f32[1,1], index: 0, kind: input, shape index: {}]
  %s1 = inlined_call_operand.hbm [shape: f32[4,1024], index: 1, kind: input, shape index: {}]
  %s2 = inlined_call_operand.hbm [shape: f32[4,1024], index: 2, kind: output, shape index: {}]
  %s3 = sld [smem:[#allocation0]]
  $region22: #{tpu_custom_call.1} parent=0
    _
  %s5 = ssub.s32 1, %s3
  %s6 = scalar_select 0, %s5, %s3
  %7 = sst [smem:[#allocation2]] %s0
  $region1: #{tpu_custom_call.1} parent=0
    #allocation3 [shape = 'u8[16384]{0}', space=vmem, size = 0x4000, scoped, tag = 'input window, operand 1, single buffered']
    #allocation4 [shape = 's32[1]{0}', space=sflag, size = 0x4, scoped, tag = 'scoped memory for tpu_custom_call.1']
    #allocation5 [shape = 's32[1]{0}', space=sflag, size = 0x4, scoped, tag = 'scoped memory for tpu_custom_call.1']
    #allocation6 [shape = 'u8[16384]{0}', space=vmem, size = 0x4000, scoped, tag = 'output window, operand 0, single buffered']
    %8 = vsyncpa [#allocation4], 0
    %9 = vsyncpa [#allocation5], 0
    // Predicated region
    $region2: #{tpu_custom_call.1} parent=1 // pred_check
      _
    $region3: #{tpu_custom_call.1} parent=1 // pred_check_branch
      %11 = sbr.rel (0) target = $region5
    $region4: #{tpu_custom_call.1} parent=1 // pred_region
      _
    $region5: #{tpu_custom_call.1} parent=1 // pred_fallthru
      _
    // Predicated region
    $region6: #{tpu_custom_call.1} parent=1 // pred_check
      _
    $region7: #{tpu_custom_call.1} parent=1 // pred_check_branch
      %13 = sbr.rel (0) target = $region9
    $region8: #{tpu_custom_call.1} parent=1 // pred_region
      %s15 = ssub.s32 512, 512
      %16 = vsyncadd [#allocation4], %s15
      %s18 = sshll.u32 [#allocation3], 4
      %s19 = int_to_ptr.vmem [resolvable:$true] %s18
      %21 = dma.hbm_to_vmem [thread:$0]  %s1, 512, %s19, [#allocation4]
    $region9: #{tpu_custom_call.1} parent=1 // pred_fallthru
      _
    // Predicated region
    $region10: #{tpu_custom_call.1} parent=1 // pred_check
      _
    $region11: #{tpu_custom_call.1} parent=1 // pred_check_branch
      %23 = sbr.rel (0) target = $region13
    $region12: #{tpu_custom_call.1} parent=1 // pred_region
      %24 = dma.done [#allocation4], 512
    $region13: #{tpu_custom_call.1} parent=1 // pred_fallthru
      _
    %v25 = vld [vmem:[#allocation3] sm:$0xff]
    %v26 = vld [vmem:[#allocation3 + $0x8] sm:$0xff]
    %v27 = vld [vmem:[#allocation3 + $0x10] sm:$0xff]
    %v28 = vld [vmem:[#allocation3 + $0x18] sm:$0xff]
    %s29 = sld [smem:[#allocation2]]
    %v30 = vstv %s29
    %v31 = vmul.f32 %v25, %v30
    %v32 = vmul.f32 %v26, %v30
    %v33 = vmul.f32 %v27, %v30
    %v34 = vmul.f32 %v28, %v30
    %35 = vst [vmem:[#allocation6] sm:$0xff] %v31
    %36 = vst [vmem:[#allocation6 + $0x8] sm:$0xff] %v32
    %37 = vst [vmem:[#allocation6 + $0x10] sm:$0xff] %v33
    %38 = vst [vmem:[#allocation6 + $0x18] sm:$0xff] %v34
    // Predicated region
    $region14: #{tpu_custom_call.1} parent=1 // pred_check
      _
    $region15: #{tpu_custom_call.1} parent=1 // pred_check_branch
      %40 = sbr.rel (0) target = $region17
    $region16: #{tpu_custom_call.1} parent=1 // pred_region
      %s42 = ssub.s32 512, 512
      %43 = vsyncadd [#allocation5], %s42
      %s45 = sshll.u32 [#allocation6], 4
      %s46 = int_to_ptr.vmem [resolvable:$true] %s45
      %48 = dma.vmem_to_hbm [thread:$0]  %s46, 512, %s2, [#allocation5]
    $region17: #{tpu_custom_call.1} parent=1 // pred_fallthru
      _
    // Predicated region
    $region18: #{tpu_custom_call.1} parent=1 // pred_check
      _
    $region19: #{tpu_custom_call.1} parent=1 // pred_check_branch
      %50 = sbr.rel (0) target = $region21
    $region20: #{tpu_custom_call.1} parent=1 // pred_region
      %51 = dma.done [#allocation5], 512
    $region21: #{tpu_custom_call.1} parent=1 // pred_fallthru
      _
    %52 = vsyncpa [#allocation4], 1
    %53 = vsyncpa [#allocation5], 1

</llo_original>
